<compile_context>
chip_gen: v7x
topology: tpu7x:2x2x1
jax: 0.10.0
libtpu: 0.0.40
codegen_flags: <defaults>
</compile_context>

<pallas_src>
import jax
import jax.numpy as jnp
from jax.experimental import pallas as pl
from jax.experimental.pallas import tpu as pltpu


def _round_up(x, m):
    return (x + m - 1) // m * m


def _vmem_budget_bytes(frac=0.75):
    # Derive the scoped-VMEM budget from the actual chip (64 MiB/core on v7x,
    # 128 MiB on v5e/v6e) and leave headroom for compiler-internal scratch.
    cap = 64 * 1024 * 1024  # conservative fallback that fits every chip
    try:
        info = pltpu.get_tpu_info()
        cap = int(getattr(info, "vmem_capacity_bytes", cap))
    except Exception:
        pass
    return int(cap * frac)


def _logits_head_kernel(x_ref, wa_ref, wm_ref, b_ref, o_ref, avg_sc, max_sc):
    # x_ref:  [TB, C, HW]   channels on sublanes, spatial on lanes (free NCHW reshape)
    # wa_ref: [C, TN]       avg-half of W.T (class columns zero-padded)
    # wm_ref: [C, TN]       max-half of W.T
    # b_ref:  [1, TN]
    # o_ref:  [TB, TN]
    # avg_sc / max_sc: [TB, C] f32 scratch, persistent across the NC grid axis.

    # Pool once per batch tile: the x block index is constant across the NC axis,
    # so no re-DMA happens and the pooled result is reused for every NC tile.
    @pl.when(pl.program_id(1) == 0)
    def _():
        hw = x_ref.shape[-1]  # HW is never padded -> exact mean divisor, exact max
        # max on the native dtype; sum accumulated in f32 (no full f32 block copy).
        max_sc[...] = jnp.max(x_ref[...], axis=-1).astype(jnp.float32)
        avg_sc[...] = jnp.sum(x_ref[...], axis=-1, dtype=jnp.float32) * (1.0 / hw)

    # concat([avg, max], 1) @ W.T  ==  avg @ Wa + max @ Wm   (no [TB, 2C] concat copy).
    wdt = wa_ref.dtype  # pass bf16 weights to feed the MXU at bf16 on v6e/v7x
    acc = jnp.dot(avg_sc[...].astype(wdt), wa_ref[...],
                  preferred_element_type=jnp.float32)
    acc = acc + jnp.dot(max_sc[...].astype(wdt), wm_ref[...],
                        preferred_element_type=jnp.float32)
    o_ref[...] = (acc + b_ref[...].astype(jnp.float32)).astype(o_ref.dtype)


def prepare_logits_head_params(weight, bias):
    """One-time parameter preparation (hoist out of the per-call path).

    weight: [NC, 2C] (PyTorch Linear layout), bias: [NC].
    Returns (w_avg [C, NC_pad], w_max [C, NC_pad], b_pad [1, NC_pad], NC) with the
    class axis zero-padded to a multiple of 128 for lane-dense output stores.
    """
    NC, twoC = weight.shape
    assert twoC % 2 == 0, "weight must have in_features == 2*C (concat pooling)"
    C = twoC // 2
    NC_pad = _round_up(NC, 128)
    w_avg = jnp.zeros((C, NC_pad), weight.dtype).at[:, :NC].set(weight[:, :C].T)
    w_max = jnp.zeros((C, NC_pad), weight.dtype).at[:, :NC].set(weight[:, C:].T)
    b_pad = jnp.zeros((1, NC_pad), bias.dtype).at[0, :NC].set(bias)
    return w_avg, w_max, b_pad, NC


def _pick_tiles(B, C, HW, NC_pad, x_bytes, w_bytes, out_bytes, budget, tn):
    if tn is None:
        tn = min(NC_pad, 1024)          # multiple of 128 since NC_pad is
    num_nc_tiles = pl.cdiv(NC_pad, tn)
    wt_buffers = 1 if num_nc_tiles == 1 else 2  # constant index -> single buffer

    # Residents independent of tb: weights (x buffers) + bias, plus headroom for
    # compiler-internal scratch.
    fixed = wt_buffers * (2 * C * tn * w_bytes + tn * 4)
    headroom = 2 * 1024 * 1024

    # Per-batch-row VMEM cost:
    per_row = (2 * C * HW * x_bytes     # double-buffered input stream
               + 2 * tn * out_bytes     # double-buffered output block
               + tn * 4                 # f32 accumulator
               + 2 * C * 4              # avg/max f32 scratch
               + 2 * C * x_bytes)       # misc vreg temporaries
    avail = budget - fixed - headroom
    max_rows = max(1, avail // per_row)

    if B <= 8:
        tb = B                          # block equals the full batch dim (valid layout)
    else:
        # Keep >= 2 batch tiles so v7x's two TensorCores both get work
        # (harmless extra grid step on single-TC v5e/v6e).
        half = _round_up(-(-B // 2), 8)
        tb = min(max_rows, half, B)
        tb = max(8, (tb // 8) * 8)      # sublane-aligned blocks
    return tb, tn, num_nc_tiles


def _pallas_logits_call(x_flat, w_avg, w_max, b_pad, *, tb, tn, out_dtype,
                        vmem_limit_bytes, single_buffer_weights):
    B, C, HW = x_flat.shape
    NC_pad = w_avg.shape[1]
    grid = (pl.cdiv(B, tb), pl.cdiv(NC_pad, tn))

    # Constant-index weight/bias blocks do not need a second pipeline buffer.
    wspec_kwargs = dict(pipeline_mode=pl.Buffered(1)) if single_buffer_weights else {}

    return pl.pallas_call(
        _logits_head_kernel,
        out_shape=jax.ShapeDtypeStruct((B, NC_pad), out_dtype),
        grid_spec=pltpu.PrefetchScalarGridSpec(
            num_scalar_prefetch=0,
            grid=grid,
            in_specs=[
                pl.BlockSpec((tb, C, HW), lambda i, j: (i, 0, 0)),
                pl.BlockSpec((C, tn), lambda i, j: (0, j), **wspec_kwargs),
                pl.BlockSpec((C, tn), lambda i, j: (0, j), **wspec_kwargs),
                pl.BlockSpec((1, tn), lambda i, j: (0, j), **wspec_kwargs),
            ],
            out_specs=pl.BlockSpec((tb, tn), lambda i, j: (i, j)),
            scratch_shapes=[
                pltpu.VMEM((tb, C), jnp.float32),  # pooled avg, persists over NC axis
                pltpu.VMEM((tb, C), jnp.float32),  # pooled max
            ],
        ),
        compiler_params=pltpu.CompilerParams(
            # Batch tiles shard across the 2 TCs on v7x; the NC axis is sequential
            # because the pooled scratch is written at j == 0 and reused for j > 0.
            dimension_semantics=("parallel", "arbitrary"),
            vmem_limit_bytes=vmem_limit_bytes,
        ),
    )(x_flat, w_avg, w_max, b_pad)


def logits_head_apply(x_nchw, w_avg, w_max, b_pad, num_classes, *, tb=None, tn=None):
    """LogitsHead forward with pre-prepared params (see prepare_logits_head_params)."""
    B, C, H, W = x_nchw.shape
    assert w_avg.shape[0] == C and w_max.shape[0] == C
    HW = H * W
    NC_pad = w_avg.shape[1]
    out_dtype = x_nchw.dtype

    # Free reshape of NCHW -> [B, C, HW]; no materialized NHWC transpose of x.
    x_flat = x_nchw.reshape(B, C, HW)

    budget = _vmem_budget_bytes()
    auto_tb, tn, num_nc_tiles = _pick_tiles(
        B, C, HW, NC_pad,
        x_flat.dtype.itemsize, w_avg.dtype.itemsize,
        jnp.dtype(out_dtype).itemsize, budget, tn)
    if tb is None:
        tb = auto_tb

    def call(single_buffer_weights):
        out = _pallas_logits_call(
            x_flat, w_avg, w_max, b_pad,
            tb=tb, tn=tn, out_dtype=out_dtype,
            vmem_limit_bytes=budget,
            single_buffer_weights=single_buffer_weights)
        return jax.block_until_ready(out)

    if num_nc_tiles == 1:
        try:
            out_padded = call(True)
        except Exception:
            # Fallback if single-buffering via pipeline_mode is unsupported here.
            out_padded = call(False)
    else:
        out_padded = call(False)

    # Padded class columns are zero-weight/zero-bias and sliced off here; partial
    # trailing batch blocks only produce garbage in rows >= B, which are clipped.
    return out_padded[:, :num_classes]


def logits_head(x_nchw, weight, bias, *, tb=None, tn=None):
    """Convenience wrapper. In production, run prepare_logits_head_params once at
    parameter-load time and reuse the prepared params across forward calls."""
    w_avg, w_max, b_pad, nc = prepare_logits_head_params(weight, bias)
    return logits_head_apply(x_nchw, w_avg, w_max, b_pad, nc, tb=tb, tn=tn)


if __name__ == "__main__":
    # Small shapes consistent with the module: C channels -> Linear(2C, num_classes).
    B, C, H, W = 2, 4, 16, 16
    NUM_CLASSES = 10

    key = jax.random.PRNGKey(0)
    kx, kw, kb = jax.random.split(key, 3)

    x = jax.random.normal(kx, (B, C, H, W), dtype=jnp.float32)
    bound = 1.0 / jnp.sqrt(2.0 * C)
    weight = jax.random.uniform(
        kw, (NUM_CLASSES, 2 * C), minval=-bound, maxval=bound, dtype=jnp.float32
    )
    bias = jax.random.uniform(
        kb, (NUM_CLASSES,), minval=-bound, maxval=bound, dtype=jnp.float32
    )

    # One-time parameter preparation (hoisted out of the per-call path).
    w_avg, w_max, b_pad, nc = prepare_logits_head_params(weight, bias)
    w_avg, w_max, b_pad = jax.block_until_ready((w_avg, w_max, b_pad))

    out = logits_head_apply(x, w_avg, w_max, b_pad, nc)
    out = jax.block_until_ready(out)

    # Sanity check against a pure-JAX reference of the same math.
    avg_ref = jnp.mean(x, axis=(2, 3))
    max_ref = jnp.max(x, axis=(2, 3))
    ref = jnp.concatenate([avg_ref, max_ref], axis=1) @ weight.T + bias
    assert out.shape == (B, NUM_CLASSES)
    assert jnp.allclose(out, ref, atol=1e-4, rtol=1e-4), float(jnp.max(jnp.abs(out - ref)))

    print("KERNEL_OK")
</pallas_src>

<mosaic_0001>
module attributes {stable_mosaic.version = 11 : i64} {
  func.func @_logits_head_kernel(%arg0: i32, %arg1: i32, %arg2: memref<2x4x256xf32, #tpu.memory_space<vmem>>, %arg3: memref<4x128xf32, #tpu.memory_space<vmem>>, %arg4: memref<4x128xf32, #tpu.memory_space<vmem>>, %arg5: memref<1x128xf32, #tpu.memory_space<vmem>>, %arg6: memref<2x128xf32, #tpu.memory_space<vmem>>, %arg7: memref<2x4xf32, #tpu.memory_space<vmem>>, %arg8: memref<2x4xf32, #tpu.memory_space<vmem>>) attributes {dimension_semantics = [#tpu.dimension_semantics<parallel>, #tpu.dimension_semantics<arbitrary>], iteration_bounds = array<i64: 1, 1>, scalar_prefetch = 0 : i64, scratch_operands = 2 : i64, tpu.core_type = #tpu.core_type<tc>, window_params = [{transform_indices = @transform_0, window_bounds = array<i64: 2, 4, 256>}, {pipeline_mode = #tpu.pipeline_mode<synchronous>, transform_indices = @transform_1, window_bounds = array<i64: 4, 128>}, {pipeline_mode = #tpu.pipeline_mode<synchronous>, transform_indices = @transform_2, window_bounds = array<i64: 4, 128>}, {pipeline_mode = #tpu.pipeline_mode<synchronous>, transform_indices = @transform_3, window_bounds = array<i64: 1, 128>}, {transform_indices = @transform_4, window_bounds = array<i64: 2, 128>}]} {
    %c0_i32 = arith.constant 0 : i32
    %0 = arith.cmpi eq, %arg1, %c0_i32 : i32
    %1 = arith.extui %0 : i1 to i32
    %c0_i32_0 = arith.constant 0 : i32
    %2 = arith.cmpi ne, %1, %c0_i32_0 : i32
    scf.if %2 {
      %c0_13 = arith.constant 0 : index
      %c0_14 = arith.constant 0 : index
      %c0_15 = arith.constant 0 : index
      %14 = vector.load %arg2[%c0_13, %c0_14, %c0_15] : memref<2x4x256xf32, #tpu.memory_space<vmem>>, vector<2x4x256xf32>
      %cst_16 = arith.constant dense<0xFF800000> : vector<2x4xf32>
      %15 = vector.multi_reduction <maximumf>, %14, %cst_16 [2] : vector<2x4x256xf32> to vector<2x4xf32>
      %c0_17 = arith.constant 0 : index
      %c0_18 = arith.constant 0 : index
      %16 = vector.load %arg8[%c0_17, %c0_18] : memref<2x4xf32, #tpu.memory_space<vmem>>, vector<2x4xf32>
      tpu.vector_store %arg8[%c0_17, %c0_18], %15 {strides = array<i32>} : memref<2x4xf32, #tpu.memory_space<vmem>>, vector<2x4xf32>,
      %c0_19 = arith.constant 0 : index
      %c0_20 = arith.constant 0 : index
      %c0_21 = arith.constant 0 : index
      %17 = vector.load %arg2[%c0_19, %c0_20, %c0_21] : memref<2x4x256xf32, #tpu.memory_space<vmem>>, vector<2x4x256xf32>
      %cst_22 = arith.constant dense<0.000000e+00> : vector<2x4xf32>
      %18 = vector.multi_reduction <add>, %17, %cst_22 [2] : vector<2x4x256xf32> to vector<2x4xf32>
      %cst_23 = arith.constant 3.906250e-03 : f32
      %19 = vector.broadcast %cst_23 : f32 to vector<2x4xf32>
      %20 = arith.mulf %18, %19 : vector<2x4xf32>
      %c0_24 = arith.constant 0 : index
      %c0_25 = arith.constant 0 : index
      %21 = vector.load %arg7[%c0_24, %c0_25] : memref<2x4xf32, #tpu.memory_space<vmem>>, vector<2x4xf32>
      tpu.vector_store %arg7[%c0_24, %c0_25], %20 {strides = array<i32>} : memref<2x4xf32, #tpu.memory_space<vmem>>, vector<2x4xf32>,
    } else {
    }
    %c0 = arith.constant 0 : index
    %c0_1 = arith.constant 0 : index
    %3 = vector.load %arg7[%c0, %c0_1] : memref<2x4xf32, #tpu.memory_space<vmem>>, vector<2x4xf32>
    %c0_2 = arith.constant 0 : index
    %c0_3 = arith.constant 0 : index
    %4 = vector.load %arg3[%c0_2, %c0_3] : memref<4x128xf32, #tpu.memory_space<vmem>>, vector<4x128xf32>
    %cst = arith.constant dense<0.000000e+00> : vector<2x128xf32>
    %5 = tpu.matmul %3, %4, %cst {dimension_numbers = #tpu.dot_dimension_numbers<[1], [0], [0], [1], [0, 0, 1, 1], [], []>} : vector<2x4xf32>, vector<4x128xf32>, vector<2x128xf32> -> vector<2x128xf32>
    %c0_4 = arith.constant 0 : index
    %c0_5 = arith.constant 0 : index
    %6 = vector.load %arg8[%c0_4, %c0_5] : memref<2x4xf32, #tpu.memory_space<vmem>>, vector<2x4xf32>
    %c0_6 = arith.constant 0 : index
    %c0_7 = arith.constant 0 : index
    %7 = vector.load %arg4[%c0_6, %c0_7] : memref<4x128xf32, #tpu.memory_space<vmem>>, vector<4x128xf32>
    %cst_8 = arith.constant dense<0.000000e+00> : vector<2x128xf32>
    %8 = tpu.matmul %6, %7, %cst_8 {dimension_numbers = #tpu.dot_dimension_numbers<[1], [0], [0], [1], [0, 0, 1, 1], [], []>} : vector<2x4xf32>, vector<4x128xf32>, vector<2x128xf32> -> vector<2x128xf32>
    %9 = arith.addf %5, %8 : vector<2x128xf32>
    %c0_9 = arith.constant 0 : index
    %c0_10 = arith.constant 0 : index
    %10 = vector.load %arg5[%c0_9, %c0_10] : memref<1x128xf32, #tpu.memory_space<vmem>>, vector<1x128xf32>
    %11 = vector.broadcast %10 : vector<1x128xf32> to vector<2x128xf32>
    %12 = arith.addf %9, %11 : vector<2x128xf32>
    %c0_11 = arith.constant 0 : index
    %c0_12 = arith.constant 0 : index
    %13 = vector.load %arg6[%c0_11, %c0_12] : memref<2x128xf32, #tpu.memory_space<vmem>>, vector<2x128xf32>
    tpu.vector_store %arg6[%c0_11, %c0_12], %12 {strides = array<i32>} : memref<2x128xf32, #tpu.memory_space<vmem>>, vector<2x128xf32>,
    return
  }
  func.func @transform_0(%arg0: i32, %arg1: i32) -> (i32, i32, i32) {
    %c0_i32 = arith.constant 0 : i32
    %c0_i32_0 = arith.constant 0 : i32
    %c0_i32_1 = arith.constant 0 : i32
    return %arg0, %c0_i32, %c0_i32_0 : i32, i32, i32
  }
  func.func @transform_1(%arg0: i32, %arg1: i32) -> (i32, i32) {
    %c0_i32 = arith.constant 0 : i32
    %c0_i32_0 = arith.constant 0 : i32
    return %c0_i32, %arg1 : i32, i32
  }
  func.func @transform_2(%arg0: i32, %arg1: i32) -> (i32, i32) {
    %c0_i32 = arith.constant 0 : i32
    %c0_i32_0 = arith.constant 0 : i32
    return %c0_i32, %arg1 : i32, i32
  }
  func.func @transform_3(%arg0: i32, %arg1: i32) -> (i32, i32) {
    %c0_i32 = arith.constant 0 : i32
    %c0_i32_0 = arith.constant 0 : i32
    return %c0_i32, %arg1 : i32, i32
  }
  func.func @transform_4(%arg0: i32, %arg1: i32) -> (i32, i32) {
    %c0_i32 = arith.constant 0 : i32
    return %arg0, %arg1 : i32, i32
  }
}

module attributes {stable_mosaic.version = 11 : i64} {
  func.func @_logits_head_kernel(%arg0: i32, %arg1: i32, %arg2: memref<2x4x256xf32, #tpu.memory_space<vmem>>, %arg3: memref<4x128xf32, #tpu.memory_space<vmem>>, %arg4: memref<4x128xf32, #tpu.memory_space<vmem>>, %arg5: memref<1x128xf32, #tpu.memory_space<vmem>>, %arg6: memref<2x128xf32, #tpu.memory_space<vmem>>, %arg7: memref<2x4xf32, #tpu.memory_space<vmem>>, %arg8: memref<2x4xf32, #tpu.memory_space<vmem>>) attributes {dimension_semantics = [#tpu.dimension_semantics<parallel>, #tpu.dimension_semantics<arbitrary>], iteration_bounds = array<i64: 1, 1>, scalar_prefetch = 0 : i64, scratch_operands = 2 : i64, tpu.core_type = #tpu.core_type<tc>, window_params = [{transform_indices = @transform_0, window_bounds = array<i64: 2, 4, 256>}, {transform_indices = @transform_1, window_bounds = array<i64: 4, 128>}, {transform_indices = @transform_2, window_bounds = array<i64: 4, 128>}, {transform_indices = @transform_3, window_bounds = array<i64: 1, 128>}, {transform_indices = @transform_4, window_bounds = array<i64: 2, 128>}]} {
    %c0_i32 = arith.constant 0 : i32
    %0 = arith.cmpi eq, %arg1, %c0_i32 : i32
    %1 = arith.extui %0 : i1 to i32
    %c0_i32_0 = arith.constant 0 : i32
    %2 = arith.cmpi ne, %1, %c0_i32_0 : i32
    scf.if %2 {
      %c0_13 = arith.constant 0 : index
      %c0_14 = arith.constant 0 : index
      %c0_15 = arith.constant 0 : index
      %14 = vector.load %arg2[%c0_13, %c0_14, %c0_15] : memref<2x4x256xf32, #tpu.memory_space<vmem>>, vector<2x4x256xf32>
      %cst_16 = arith.constant dense<0xFF800000> : vector<2x4xf32>
      %15 = vector.multi_reduction <maximumf>, %14, %cst_16 [2] : vector<2x4x256xf32> to vector<2x4xf32>
      %c0_17 = arith.constant 0 : index
      %c0_18 = arith.constant 0 : index
      %16 = vector.load %arg8[%c0_17, %c0_18] : memref<2x4xf32, #tpu.memory_space<vmem>>, vector<2x4xf32>
      tpu.vector_store %arg8[%c0_17, %c0_18], %15 {strides = array<i32>} : memref<2x4xf32, #tpu.memory_space<vmem>>, vector<2x4xf32>,
      %c0_19 = arith.constant 0 : index
      %c0_20 = arith.constant 0 : index
      %c0_21 = arith.constant 0 : index
      %17 = vector.load %arg2[%c0_19, %c0_20, %c0_21] : memref<2x4x256xf32, #tpu.memory_space<vmem>>, vector<2x4x256xf32>
      %cst_22 = arith.constant dense<0.000000e+00> : vector<2x4xf32>
      %18 = vector.multi_reduction <add>, %17, %cst_22 [2] : vector<2x4x256xf32> to vector<2x4xf32>
      %cst_23 = arith.constant 3.906250e-03 : f32
      %19 = vector.broadcast %cst_23 : f32 to vector<2x4xf32>
      %20 = arith.mulf %18, %19 : vector<2x4xf32>
      %c0_24 = arith.constant 0 : index
      %c0_25 = arith.constant 0 : index
      %21 = vector.load %arg7[%c0_24, %c0_25] : memref<2x4xf32, #tpu.memory_space<vmem>>, vector<2x4xf32>
      tpu.vector_store %arg7[%c0_24, %c0_25], %20 {strides = array<i32>} : memref<2x4xf32, #tpu.memory_space<vmem>>, vector<2x4xf32>,
    } else {
    }
    %c0 = arith.constant 0 : index
    %c0_1 = arith.constant 0 : index
    %3 = vector.load %arg7[%c0, %c0_1] : memref<2x4xf32, #tpu.memory_space<vmem>>, vector<2x4xf32>
    %c0_2 = arith.constant 0 : index
    %c0_3 = arith.constant 0 : index
    %4 = vector.load %arg3[%c0_2, %c0_3] : memref<4x128xf32, #tpu.memory_space<vmem>>, vector<4x128xf32>
    %cst = arith.constant dense<0.000000e+00> : vector<2x128xf32>
    %5 = tpu.matmul %3, %4, %cst {dimension_numbers = #tpu.dot_dimension_numbers<[1], [0], [0], [1], [0, 0, 1, 1], [], []>} : vector<2x4xf32>, vector<4x128xf32>, vector<2x128xf32> -> vector<2x128xf32>
    %c0_4 = arith.constant 0 : index
    %c0_5 = arith.constant 0 : index
    %6 = vector.load %arg8[%c0_4, %c0_5] : memref<2x4xf32, #tpu.memory_space<vmem>>, vector<2x4xf32>
    %c0_6 = arith.constant 0 : index
    %c0_7 = arith.constant 0 : index
    %7 = vector.load %arg4[%c0_6, %c0_7] : memref<4x128xf32, #tpu.memory_space<vmem>>, vector<4x128xf32>
    %cst_8 = arith.constant dense<0.000000e+00> : vector<2x128xf32>
    %8 = tpu.matmul %6, %7, %cst_8 {dimension_numbers = #tpu.dot_dimension_numbers<[1], [0], [0], [1], [0, 0, 1, 1], [], []>} : vector<2x4xf32>, vector<4x128xf32>, vector<2x128xf32> -> vector<2x128xf32>
    %9 = arith.addf %5, %8 : vector<2x128xf32>
    %c0_9 = arith.constant 0 : index
    %c0_10 = arith.constant 0 : index
    %10 = vector.load %arg5[%c0_9, %c0_10] : memref<1x128xf32, #tpu.memory_space<vmem>>, vector<1x128xf32>
    %11 = vector.broadcast %10 : vector<1x128xf32> to vector<2x128xf32>
    %12 = arith.addf %9, %11 : vector<2x128xf32>
    %c0_11 = arith.constant 0 : index
    %c0_12 = arith.constant 0 : index
    %13 = vector.load %arg6[%c0_11, %c0_12] : memref<2x128xf32, #tpu.memory_space<vmem>>, vector<2x128xf32>
    tpu.vector_store %arg6[%c0_11, %c0_12], %12 {strides = array<i32>} : memref<2x128xf32, #tpu.memory_space<vmem>>, vector<2x128xf32>,
    return
  }
  func.func @transform_0(%arg0: i32, %arg1: i32) -> (i32, i32, i32) {
    %c0_i32 = arith.constant 0 : i32
    %c0_i32_0 = arith.constant 0 : i32
    %c0_i32_1 = arith.constant 0 : i32
    return %arg0, %c0_i32, %c0_i32_0 : i32, i32, i32
  }
  func.func @transform_1(%arg0: i32, %arg1: i32) -> (i32, i32) {
    %c0_i32 = arith.constant 0 : i32
    %c0_i32_0 = arith.constant 0 : i32
    return %c0_i32, %arg1 : i32, i32
  }
  func.func @transform_2(%arg0: i32, %arg1: i32) -> (i32, i32) {
    %c0_i32 = arith.constant 0 : i32
    %c0_i32_0 = arith.constant 0 : i32
    return %c0_i32, %arg1 : i32, i32
  }
  func.func @transform_3(%arg0: i32, %arg1: i32) -> (i32, i32) {
    %c0_i32 = arith.constant 0 : i32
    %c0_i32_0 = arith.constant 0 : i32
    return %c0_i32, %arg1 : i32, i32
  }
  func.func @transform_4(%arg0: i32, %arg1: i32) -> (i32, i32) {
    %c0_i32 = arith.constant 0 : i32
    return %arg0, %arg1 : i32, i32
  }
}

</mosaic_0001>

<llo_original>
// kernel: tpu_custom_call.1
$region0: #{tpu_custom_call.1}
  #allocation0 [shape = 'u32[]', space=smem, size = 0x4, offset = 0x4, fixed_abs, tag = 'smem constant byte address 0x4 - core index']
  #allocation1 [shape = 'u32[144,128]{1,0:T(1,128)}', space=vmem, size = 0x12000, scoped, tag = 'internal scratch']
  #allocation2 [shape = 'f32[2,4]{1,0:T(2,128)}', space=vmem, size = 0x400, scoped, tag = 'scratch operand']
  #allocation3 [shape = 'f32[2,4]{1,0:T(2,128)}', space=vmem, size = 0x400, scoped, tag = 'scratch operand']
  %s0 = inlined_call_operand.hbm [shape: f32[2,4,256], index: 0, kind: input, shape index: {}]
  %s1 = inlined_call_operand.hbm [shape: f32[4,128], index: 1, kind: input, shape index: {}]
  %s2 = inlined_call_operand.vmem [shape: f32[4,128], index: 2, kind: input, shape index: {}]
  %s3 = inlined_call_operand.vmem [shape: f32[1,128], index: 3, kind: input, shape index: {}]
  %s4 = inlined_call_operand.hbm [shape: f32[2,128], index: 4, kind: output, shape index: {}]
  %s5 = sld [smem:[#allocation0]]
  $region38: #{tpu_custom_call.1} parent=0
    _
  %s7 = ssub.s32 1, %s5
  %s8 = scalar_select 0, %s7, %s5
  $region1: #{tpu_custom_call.1} parent=0
    #allocation4 [shape = 'u8[8192]{0}', space=vmem, size = 0x2000, scoped, tag = 'input window, operand 0, single buffered']
    #allocation5 [shape = 's32[1]{0}', space=sflag, size = 0x4, scoped, tag = 'scoped memory for tpu_custom_call.1']
    #allocation6 [shape = 's32[1]{0}', space=sflag, size = 0x4, scoped, tag = 'scoped memory for tpu_custom_call.1']
    #allocation7 [shape = 'u8[2048]{0}', space=vmem, size = 0x800, scoped, tag = 'input window, operand 1, single buffered']
    #allocation8 [shape = 's32[1]{0}', space=sflag, size = 0x4, scoped, tag = 'scoped memory for tpu_custom_call.1']
    #allocation9 [shape = 'u8[1024]{0}', space=vmem, size = 0x400, scoped, tag = 'output window, operand 0, single buffered']
    %9 = vsyncpa [#allocation5], 0
    %10 = vsyncpa [#allocation8], 0
    %11 = vsyncpa [#allocation6], 0
    // Predicated region
    $region2: #{tpu_custom_call.1} parent=1 // pred_check
      _
    $region3: #{tpu_custom_call.1} parent=1 // pred_check_branch
      %13 = sbr.rel (0) target = $region5
    $region4: #{tpu_custom_call.1} parent=1 // pred_region
      %s15 = ssub.s32 256, 256
      %16 = vsyncadd [#allocation5], %s15
      %s17 = sshll.u32 [#allocation4], 4
      %s18 = int_to_ptr.vmem [resolvable:$true] %s17
      %23 = dma.hbm_to_vmem [thread:$0]  %s0, 256, %s18, [#allocation5], 128, 128, 8
    $region5: #{tpu_custom_call.1} parent=1 // pred_fallthru
      _
    // Predicated region
    $region6: #{tpu_custom_call.1} parent=1 // pred_check
      _
    $region7: #{tpu_custom_call.1} parent=1 // pred_check_branch
      %25 = sbr.rel (0) target = $region9
    $region8: #{tpu_custom_call.1} parent=1 // pred_region
      %s27 = ssub.s32 64, 64
      %28 = vsyncadd [#allocation8], %s27
      %s30 = sshll.u32 [#allocation7], 4
      %s31 = int_to_ptr.vmem [resolvable:$true] %s30
      %33 = dma.hbm_to_vmem [thread:$0]  %s1, 64, %s31, [#allocation8]
    $region9: #{tpu_custom_call.1} parent=1 // pred_fallthru
      _
    // Predicated region
    $region10: #{tpu_custom_call.1} parent=1 // pred_check
      _
    $region11: #{tpu_custom_call.1} parent=1 // pred_check_branch
      %35 = sbr.rel (0) target = $region13
    $region12: #{tpu_custom_call.1} parent=1 // pred_region
      _
    $region13: #{tpu_custom_call.1} parent=1 // pred_fallthru
      _
    // Predicated region
    $region14: #{tpu_custom_call.1} parent=1 // pred_check
      _
    $region15: #{tpu_custom_call.1} parent=1 // pred_check_branch
      %37 = sbr.rel (0) target = $region17
    $region16: #{tpu_custom_call.1} parent=1 // pred_region
      _
    $region17: #{tpu_custom_call.1} parent=1 // pred_fallthru
      _
    // Predicated region
    $region18: #{tpu_custom_call.1} parent=1 // pred_check
      _
    $region19: #{tpu_custom_call.1} parent=1 // pred_check_branch
      %39 = sbr.rel (0) target = $region21
    $region20: #{tpu_custom_call.1} parent=1 // pred_region
      %40 = dma.done [#allocation5], 256
    $region21: #{tpu_custom_call.1} parent=1 // pred_fallthru
      _
    // Predicated region
    $region22: #{tpu_custom_call.1} parent=1 // pred_check
      _
    $region23: #{tpu_custom_call.1} parent=1 // pred_check_branch
      %42 = sbr.rel (0) target = $region25
    $region24: #{tpu_custom_call.1} parent=1 // pred_region
      %43 = dma.done [#allocation8], 64
    $region25: #{tpu_custom_call.1} parent=1 // pred_fallthru
      _
    %p44 = scmp.eq.s32.totalorder 0, 0
    // Predicated region
    $region26: #{tpu_custom_call.1} parent=1 // pred_check
      %p45 = pneg %p44
    $region27: #{tpu_custom_call.1} parent=1 // pred_check_branch
      %47 = sbr.rel (%p45) target = $region29
    $region28: #{tpu_custom_call.1} parent=1 // pred_region
      %v48 = vld [vmem:[#allocation4] sm:$0xff]
      %v49 = vld [vmem:[#allocation4 + $0x8] sm:$0xff]
      %v52 = vcombine.high %v48, %v48
      %v53 = vcombine.high %v49, %v49
      %vm56 = vcmask 1043456
      %v57 = vsel %vm56, %v48, -inf
      %v58 = vsel %vm56, %v52, -inf
      %v59 = vmax.f32 %v57, %v58
      %60 = vmax.xlane.f32.xlu0 %v59
      %v61 = vpop.xlane.xlu0 %60
      %v62 = vsel %vm56, %v49, -inf
      %v63 = vsel %vm56, %v53, -inf
      %v64 = vmax.f32 %v62, %v63
      %65 = vmax.xlane.f32.xlu0 %v64
      %v66 = vpop.xlane.xlu0 %65
      %v69 = vlaneseq
      %v70 = vand.u32 %v69, 127
      %v71 = vlaneseq
      %v72 = vshrl.u32 %v71, 7
      %v73 = vsub.s32 %v70, %v72
      %v74 = vrot.slane %v61, %v73
      %v75 = vlaneseq
      %v76 = vshrl.u32 %v75, 7
      %v77 = vsub.s32 %v70, %v76
      %v78 = vrot.slane %v66, %v77
      %vm79 = vcmask 1041409
      %v80 = vsel %vm79, %v78, %v74
      %vm82 = vcmask 25600
      %83 = vst.msk [vmem:[#allocation3] sm:$0x3] %vm82, %v80
      %v84 = vld [vmem:[#allocation4] sm:$0xff]
      %v85 = vld [vmem:[#allocation4 + $0x8] sm:$0xff]
      %v88 = vcombine.high %v84, %v84
      %v89 = vcombine.high %v85, %v85
      %v92 = vsel %vm56, %v84, 0.0
      %v93 = vsel %vm56, %v88, 0.0
      %v94 = vadd.f32 %v92, %v93
      %95 = vadd.xlane.f32.xlu0 %v94
      %v96 = vpop.xlane.xlu0 %95
      %v97 = vsel %vm56, %v85, 0.0
      %v98 = vsel %vm56, %v89, 0.0
      %v99 = vadd.f32 %v97, %v98
      %100 = vadd.xlane.f32.xlu0 %v99
      %v101 = vpop.xlane.xlu0 %100
      %v102 = vmul.f32 %v96, 0.00390625
      %v103 = vmul.f32 %v101, 0.00390625
      %v106 = vlaneseq
      %v107 = vshrl.u32 %v106, 7
      %v108 = vsub.s32 %v70, %v107
      %v109 = vrot.slane %v102, %v108
      %v110 = vlaneseq
      %v111 = vshrl.u32 %v110, 7
      %v112 = vsub.s32 %v70, %v111
      %v113 = vrot.slane %v103, %v112
      %v114 = vsel %vm79, %v113, %v109
      %116 = vst.msk [vmem:[#allocation2] sm:$0x3] %vm82, %v114
    $region29: #{tpu_custom_call.1} parent=1 // pred_fallthru
      _
    %v117 = vld [vmem:[#allocation2] sm:$0x3]
    %v118 = vld [vmem:[#allocation7] sm:$0xf]
    %v119 = vld [vmem:[#allocation3] sm:$0x3]
    %v120 = vld [vmem:[%s2] sm:$0xf]
    %vm121 = vcmask 31744
    %v123 = vsel %vm121, %v119, 0
    %vm125 = vcmask 1043456
    %v127 = vsel %vm125, %v120, 0
    %129 = vmatprep.subr.mxu0 0.0
    %130 = vmatpush1.msra.mxu0 %v127
    %131 = vmatprep.subr.mxu0 0.0
    %132 = vmatpush1.msra.mxu0 0.0
    %133 = vmatprep.subr.mxu0 0.0
    %134 = vmatpush1.msra.mxu0 0.0
    %135 = vmatprep.subr.mxu0 0.0
    %136 = vmatpush1.msra.mxu0 0.0
    %137 = vmatprep.subr.mxu0 0.0
    %138 = vmatpush1.msra.mxu0 0.0
    %139 = vmatprep.subr.mxu0 0.0
    %140 = vmatpush1.msra.mxu0 0.0
    %141 = vmatprep.subr.mxu0 0.0
    %142 = vmatpush1.msra.mxu0 0.0
    %143 = vmatprep.subr.mxu0 0.0
    %144 = vmatpush1.msra.mxu0 0.0
    %145 = vmatprep.subr.mxu0 0.0
    %146 = vmatpush1.msra.mxu0 0.0
    %147 = vmatprep.subr.mxu0 0.0
    %148 = vmatpush1.msra.mxu0 0.0
    %149 = vmatprep.subr.mxu0 0.0
    %150 = vmatpush1.msra.mxu0 0.0
    %151 = vmatprep.subr.mxu0 0.0
    %152 = vmatpush1.msra.mxu0 0.0
    %153 = vmatprep.subr.mxu0 0.0
    %154 = vmatpush1.msra.mxu0 0.0
    %155 = vmatprep.subr.mxu0 0.0
    %156 = vmatpush1.msra.mxu0 0.0
    %157 = vmatprep.subr.mxu0 0.0
    %158 = vmatpush1.msra.mxu0 0.0
    %159 = vmatprep.subr.mxu0 0.0
    %160 = vmatpush1.msra.mxu0 0.0
    %161 = vmatprep.subr.mxu0 0.0
    %162 = vmatpush1.msra.mxu0 0.0
    %163 = vmatprep.subr.mxu0 0.0
    %164 = vmatpush1.msra.mxu0 0.0
    %165 = vmatprep.subr.mxu0 0.0
    %166 = vmatpush1.msra.mxu0 0.0
    %167 = vmatprep.subr.mxu0 0.0
    %168 = vmatpush1.msra.mxu0 0.0
    %169 = vmatprep.subr.mxu0 0.0
    %170 = vmatpush1.msra.mxu0 0.0
    %171 = vmatprep.subr.mxu0 0.0
    %172 = vmatpush1.msra.mxu0 0.0
    %173 = vmatprep.subr.mxu0 0.0
    %174 = vmatpush1.msra.mxu0 0.0
    %175 = vmatprep.subr.mxu0 0.0
    %176 = vmatpush1.msra.mxu0 0.0
    %177 = vmatprep.subr.mxu0 0.0
    %178 = vmatpush1.msra.mxu0 0.0
    %179 = vmatprep.subr.mxu0 0.0
    %180 = vmatpush1.msra.mxu0 0.0
    %181 = vmatprep.subr.mxu0 0.0
    %182 = vmatpush1.msra.mxu0 0.0
    %183 = vmatprep.subr.mxu0 0.0
    %184 = vmatpush1.msra.mxu0 0.0
    %185 = vmatprep.subr.mxu0 0.0
    %186 = vmatpush1.msra.mxu0 0.0
    %187 = vmatprep.subr.mxu0 0.0
    %188 = vmatpush1.msra.mxu0 0.0
    %189 = vmatprep.subr.mxu0 0.0
    %190 = vmatpush1.msra.mxu0 0.0
    %191 = vmatprep.subr.mxu0 0.0
    %192 = vmatpush1.msra.mxu0 0.0
    %193 = vmatprep.mubr.f32.mxu0 0.0
    %194 = vmatmul.mubr.f32.gmra.mrb[0].mxu0 %v123
    %v195 = vpop.f32.mrb[0].mxu0
    %v196 = vadd.f32 0.0, %v195
    %v197 = vpop.f32.mrb[0].mxu0
    %198 = vdwg.mxu0
    %v200 = vsel %vm121, %v117, 0
    %v203 = vsel %vm125, %v118, 0
    %205 = vmatprep.subr.mxu0 0.0
    %206 = vmatpush1.msra.mxu0 %v203
    %207 = vmatprep.subr.mxu0 0.0
    %208 = vmatpush1.msra.mxu0 0.0
    %209 = vmatprep.subr.mxu0 0.0
    %210 = vmatpush1.msra.mxu0 0.0
    %211 = vmatprep.subr.mxu0 0.0
    %212 = vmatpush1.msra.mxu0 0.0
    %213 = vmatprep.subr.mxu0 0.0
    %214 = vmatpush1.msra.mxu0 0.0
    %215 = vmatprep.subr.mxu0 0.0
    %216 = vmatpush1.msra.mxu0 0.0
    %217 = vmatprep.subr.mxu0 0.0
    %218 = vmatpush1.msra.mxu0 0.0
    %219 = vmatprep.subr.mxu0 0.0
    %220 = vmatpush1.msra.mxu0 0.0
    %221 = vmatprep.subr.mxu0 0.0
    %222 = vmatpush1.msra.mxu0 0.0
    %223 = vmatprep.subr.mxu0 0.0
    %224 = vmatpush1.msra.mxu0 0.0
    %225 = vmatprep.subr.mxu0 0.0
    %226 = vmatpush1.msra.mxu0 0.0
    %227 = vmatprep.subr.mxu0 0.0
    %228 = vmatpush1.msra.mxu0 0.0
    %229 = vmatprep.subr.mxu0 0.0
    %230 = vmatpush1.msra.mxu0 0.0
    %231 = vmatprep.subr.mxu0 0.0
    %232 = vmatpush1.msra.mxu0 0.0
    %233 = vmatprep.subr.mxu0 0.0
    %234 = vmatpush1.msra.mxu0 0.0
    %235 = vmatprep.subr.mxu0 0.0
    %236 = vmatpush1.msra.mxu0 0.0
    %237 = vmatprep.subr.mxu0 0.0
    %238 = vmatpush1.msra.mxu0 0.0
    %239 = vmatprep.subr.mxu0 0.0
    %240 = vmatpush1.msra.mxu0 0.0
    %241 = vmatprep.subr.mxu0 0.0
    %242 = vmatpush1.msra.mxu0 0.0
    %243 = vmatprep.subr.mxu0 0.0
    %244 = vmatpush1.msra.mxu0 0.0
    %245 = vmatprep.subr.mxu0 0.0
    %246 = vmatpush1.msra.mxu0 0.0
    %247 = vmatprep.subr.mxu0 0.0
    %248 = vmatpush1.msra.mxu0 0.0
    %249 = vmatprep.subr.mxu0 0.0
    %250 = vmatpush1.msra.mxu0 0.0
    %251 = vmatprep.subr.mxu0 0.0
    %252 = vmatpush1.msra.mxu0 0.0
    %253 = vmatprep.subr.mxu0 0.0
    %254 = vmatpush1.msra.mxu0 0.0
    %255 = vmatprep.subr.mxu0 0.0
    %256 = vmatpush1.msra.mxu0 0.0
    %257 = vmatprep.subr.mxu0 0.0
    %258 = vmatpush1.msra.mxu0 0.0
    %259 = vmatprep.subr.mxu0 0.0
    %260 = vmatpush1.msra.mxu0 0.0
    %261 = vmatprep.subr.mxu0 0.0
    %262 = vmatpush1.msra.mxu0 0.0
    %263 = vmatprep.subr.mxu0 0.0
    %264 = vmatpush1.msra.mxu0 0.0
    %265 = vmatprep.subr.mxu0 0.0
    %266 = vmatpush1.msra.mxu0 0.0
    %267 = vmatprep.subr.mxu0 0.0
    %268 = vmatpush1.msra.mxu0 0.0
    %269 = vmatprep.mubr.f32.mxu0 0.0
    %270 = vmatmul.mubr.f32.gmra.mrb[0].mxu0 %v200
    %v271 = vpop.f32.mrb[0].mxu0
    %v272 = vadd.f32 %v196, %v271
    %v273 = vpop.f32.mrb[0].mxu0
    %274 = vdwg.mxu0
    %v275 = vld [vmem:[%s3] sm:$0x1]
    %v277 = vlaneseq
    %v278 = vshrl.u32 %v277, 7
    %v279 = vsub.s32 0, %v278
    %v280 = vrot.slane %v275, %v279
    %v282 = vadd.f32 %v272, %v280
    %283 = vst [vmem:[#allocation9] sm:$0x3] %v282
    // Predicated region
    $region30: #{tpu_custom_call.1} parent=1 // pred_check
      _
    $region31: #{tpu_custom_call.1} parent=1 // pred_check_branch
      %285 = sbr.rel (0) target = $region33
    $region32: #{tpu_custom_call.1} parent=1 // pred_region
      %s287 = ssub.s32 32, 32
      %288 = vsyncadd [#allocation6], %s287
      %s290 = sshll.u32 [#allocation9], 4
      %s291 = int_to_ptr.vmem [resolvable:$true] %s290
      %293 = dma.vmem_to_hbm [thread:$0]  %s291, 32, %s4, [#allocation6]
    $region33: #{tpu_custom_call.1} parent=1 // pred_fallthru
      _
    // Predicated region
    $region34: #{tpu_custom_call.1} parent=1 // pred_check
      _
    $region35: #{tpu_custom_call.1} parent=1 // pred_check_branch
      %295 = sbr.rel (0) target = $region37
    $region36: #{tpu_custom_call.1} parent=1 // pred_region
      %296 = dma.done [#allocation6], 32
    $region37: #{tpu_custom_call.1} parent=1 // pred_fallthru
      _
    %297 = vsyncpa [#allocation5], 1
    %298 = vsyncpa [#allocation8], 1
    %299 = vsyncpa [#allocation6], 1

// kernel: tpu_custom_call.1
$region0: #{tpu_custom_call.1}
  #allocation0 [shape = 'u32[]', space=smem, size = 0x4, offset = 0x4, fixed_abs, tag = 'smem constant byte address 0x4 - core index']
  #allocation1 [shape = 'u32[144,128]{1,0:T(1,128)}', space=vmem, size = 0x12000, scoped, tag = 'internal scratch']
  #allocation2 [shape = 'f32[2,4]{1,0:T(2,128)}', space=vmem, size = 0x400, scoped, tag = 'scratch operand']
  #allocation3 [shape = 'f32[2,4]{1,0:T(2,128)}', space=vmem, size = 0x400, scoped, tag = 'scratch operand']
  %s0 = inlined_call_operand.hbm [shape: f32[2,4,256], index: 0, kind: input, shape index: {}]
  %s1 = inlined_call_operand.hbm [shape: f32[4,128], index: 1, kind: input, shape index: {}]
  %s2 = inlined_call_operand.vmem [shape: f32[4,128], index: 2, kind: input, shape index: {}]
  %s3 = inlined_call_operand.vmem [shape: f32[1,128], index: 3, kind: input, shape index: {}]
  %s4 = inlined_call_operand.hbm [shape: f32[2,128], index: 4, kind: output, shape index: {}]
  %s5 = sld [smem:[#allocation0]]
  $region38: #{tpu_custom_call.1} parent=0
    _
  %s7 = ssub.s32 1, %s5
  %s8 = scalar_select 0, %s7, %s5
  $region1: #{tpu_custom_call.1} parent=0
    #allocation4 [shape = 'u8[8192]{0}', space=vmem, size = 0x2000, scoped, tag = 'input window, operand 0, single buffered']
    #allocation5 [shape = 's32[1]{0}', space=sflag, size = 0x4, scoped, tag = 'scoped memory for tpu_custom_call.1']
    #allocation6 [shape = 's32[1]{0}', space=sflag, size = 0x4, scoped, tag = 'scoped memory for tpu_custom_call.1']
    #allocation7 [shape = 'u8[2048]{0}', space=vmem, size = 0x800, scoped, tag = 'input window, operand 1, single buffered']
    #allocation8 [shape = 's32[1]{0}', space=sflag, size = 0x4, scoped, tag = 'scoped memory for tpu_custom_call.1']
    #allocation9 [shape = 'u8[1024]{0}', space=vmem, size = 0x400, scoped, tag = 'output window, operand 0, single buffered']
    %9 = vsyncpa [#allocation5], 0
    %10 = vsyncpa [#allocation8], 0
    %11 = vsyncpa [#allocation6], 0
    // Predicated region
    $region2: #{tpu_custom_call.1} parent=1 // pred_check
      _
    $region3: #{tpu_custom_call.1} parent=1 // pred_check_branch
      %13 = sbr.rel (0) target = $region5
    $region4: #{tpu_custom_call.1} parent=1 // pred_region
      %s15 = ssub.s32 256, 256
      %16 = vsyncadd [#allocation5], %s15
      %s17 = sshll.u32 [#allocation4], 4
      %s18 = int_to_ptr.vmem [resolvable:$true] %s17
      %23 = dma.hbm_to_vmem [thread:$0]  %s0, 256, %s18, [#allocation5], 128, 128, 8
    $region5: #{tpu_custom_call.1} parent=1 // pred_fallthru
      _
    // Predicated region
    $region6: #{tpu_custom_call.1} parent=1 // pred_check
      _
    $region7: #{tpu_custom_call.1} parent=1 // pred_check_branch
      %25 = sbr.rel (0) target = $region9
    $region8: #{tpu_custom_call.1} parent=1 // pred_region
      %s27 = ssub.s32 64, 64
      %28 = vsyncadd [#allocation8], %s27
      %s30 = sshll.u32 [#allocation7], 4
      %s31 = int_to_ptr.vmem [resolvable:$true] %s30
      %33 = dma.hbm_to_vmem [thread:$0]  %s1, 64, %s31, [#allocation8]
    $region9: #{tpu_custom_call.1} parent=1 // pred_fallthru
      _
    // Predicated region
    $region10: #{tpu_custom_call.1} parent=1 // pred_check
      _
    $region11: #{tpu_custom_call.1} parent=1 // pred_check_branch
      %35 = sbr.rel (0) target = $region13
    $region12: #{tpu_custom_call.1} parent=1 // pred_region
      _
    $region13: #{tpu_custom_call.1} parent=1 // pred_fallthru
      _
    // Predicated region
    $region14: #{tpu_custom_call.1} parent=1 // pred_check
      _
    $region15: #{tpu_custom_call.1} parent=1 // pred_check_branch
      %37 = sbr.rel (0) target = $region17
    $region16: #{tpu_custom_call.1} parent=1 // pred_region
      _
    $region17: #{tpu_custom_call.1} parent=1 // pred_fallthru
      _
    // Predicated region
    $region18: #{tpu_custom_call.1} parent=1 // pred_check
      _
    $region19: #{tpu_custom_call.1} parent=1 // pred_check_branch
      %39 = sbr.rel (0) target = $region21
    $region20: #{tpu_custom_call.1} parent=1 // pred_region
      %40 = dma.done [#allocation5], 256
    $region21: #{tpu_custom_call.1} parent=1 // pred_fallthru
      _
    // Predicated region
    $region22: #{tpu_custom_call.1} parent=1 // pred_check
      _
    $region23: #{tpu_custom_call.1} parent=1 // pred_check_branch
      %42 = sbr.rel (0) target = $region25
    $region24: #{tpu_custom_call.1} parent=1 // pred_region
      %43 = dma.done [#allocation8], 64
    $region25: #{tpu_custom_call.1} parent=1 // pred_fallthru
      _
    %p44 = scmp.eq.s32.totalorder 0, 0
    // Predicated region
    $region26: #{tpu_custom_call.1} parent=1 // pred_check
      %p45 = pneg %p44
    $region27: #{tpu_custom_call.1} parent=1 // pred_check_branch
      %47 = sbr.rel (%p45) target = $region29
    $region28: #{tpu_custom_call.1} parent=1 // pred_region
      %v48 = vld [vmem:[#allocation4] sm:$0xff]
      %v49 = vld [vmem:[#allocation4 + $0x8] sm:$0xff]
      %v52 = vcombine.high %v48, %v48
      %v53 = vcombine.high %v49, %v49
      %vm56 = vcmask 1043456
      %v57 = vsel %vm56, %v48, -inf
      %v58 = vsel %vm56, %v52, -inf
      %v59 = vmax.f32 %v57, %v58
      %60 = vmax.xlane.f32.xlu0 %v59
      %v61 = vpop.xlane.xlu0 %60
      %v62 = vsel %vm56, %v49, -inf
      %v63 = vsel %vm56, %v53, -inf
      %v64 = vmax.f32 %v62, %v63
      %65 = vmax.xlane.f32.xlu0 %v64
      %v66 = vpop.xlane.xlu0 %65
      %v69 = vlaneseq
      %v70 = vand.u32 %v69, 127
      %v71 = vlaneseq
      %v72 = vshrl.u32 %v71, 7
      %v73 = vsub.s32 %v70, %v72
      %v74 = vrot.slane %v61, %v73
      %v75 = vlaneseq
      %v76 = vshrl.u32 %v75, 7
      %v77 = vsub.s32 %v70, %v76
      %v78 = vrot.slane %v66, %v77
      %vm79 = vcmask 1041409
      %v80 = vsel %vm79, %v78, %v74
      %vm82 = vcmask 25600
      %83 = vst.msk [vmem:[#allocation3] sm:$0x3] %vm82, %v80
      %v84 = vld [vmem:[#allocation4] sm:$0xff]
      %v85 = vld [vmem:[#allocation4 + $0x8] sm:$0xff]
      %v88 = vcombine.high %v84, %v84
      %v89 = vcombine.high %v85, %v85
      %v92 = vsel %vm56, %v84, 0.0
      %v93 = vsel %vm56, %v88, 0.0
      %v94 = vadd.f32 %v92, %v93
      %95 = vadd.xlane.f32.xlu0 %v94
      %v96 = vpop.xlane.xlu0 %95
      %v97 = vsel %vm56, %v85, 0.0
      %v98 = vsel %vm56, %v89, 0.0
      %v99 = vadd.f32 %v97, %v98
      %100 = vadd.xlane.f32.xlu0 %v99
      %v101 = vpop.xlane.xlu0 %100
      %v102 = vmul.f32 %v96, 0.00390625
      %v103 = vmul.f32 %v101, 0.00390625
      %v106 = vlaneseq
      %v107 = vshrl.u32 %v106, 7
      %v108 = vsub.s32 %v70, %v107
      %v109 = vrot.slane %v102, %v108
      %v110 = vlaneseq
      %v111 = vshrl.u32 %v110, 7
      %v112 = vsub.s32 %v70, %v111
      %v113 = vrot.slane %v103, %v112
      %v114 = vsel %vm79, %v113, %v109
      %116 = vst.msk [vmem:[#allocation2] sm:$0x3] %vm82, %v114
    $region29: #{tpu_custom_call.1} parent=1 // pred_fallthru
      _
    %v117 = vld [vmem:[#allocation2] sm:$0x3]
    %v118 = vld [vmem:[#allocation7] sm:$0xf]
    %v119 = vld [vmem:[#allocation3] sm:$0x3]
    %v120 = vld [vmem:[%s2] sm:$0xf]
    %vm121 = vcmask 31744
    %v123 = vsel %vm121, %v119, 0
    %vm125 = vcmask 1043456
    %v127 = vsel %vm125, %v120, 0
    %129 = vmatprep.subr.mxu0 0.0
    %130 = vmatpush1.msra.mxu0 %v127
    %131 = vmatprep.subr.mxu0 0.0
    %132 = vmatpush1.msra.mxu0 0.0
    %133 = vmatprep.subr.mxu0 0.0
    %134 = vmatpush1.msra.mxu0 0.0
    %135 = vmatprep.subr.mxu0 0.0
    %136 = vmatpush1.msra.mxu0 0.0
    %137 = vmatprep.subr.mxu0 0.0
    %138 = vmatpush1.msra.mxu0 0.0
    %139 = vmatprep.subr.mxu0 0.0
    %140 = vmatpush1.msra.mxu0 0.0
    %141 = vmatprep.subr.mxu0 0.0
    %142 = vmatpush1.msra.mxu0 0.0
    %143 = vmatprep.subr.mxu0 0.0
    %144 = vmatpush1.msra.mxu0 0.0
    %145 = vmatprep.subr.mxu0 0.0
    %146 = vmatpush1.msra.mxu0 0.0
    %147 = vmatprep.subr.mxu0 0.0
    %148 = vmatpush1.msra.mxu0 0.0
    %149 = vmatprep.subr.mxu0 0.0
    %150 = vmatpush1.msra.mxu0 0.0
    %151 = vmatprep.subr.mxu0 0.0
    %152 = vmatpush1.msra.mxu0 0.0
    %153 = vmatprep.subr.mxu0 0.0
    %154 = vmatpush1.msra.mxu0 0.0
    %155 = vmatprep.subr.mxu0 0.0
    %156 = vmatpush1.msra.mxu0 0.0
    %157 = vmatprep.subr.mxu0 0.0
    %158 = vmatpush1.msra.mxu0 0.0
    %159 = vmatprep.subr.mxu0 0.0
    %160 = vmatpush1.msra.mxu0 0.0
    %161 = vmatprep.subr.mxu0 0.0
    %162 = vmatpush1.msra.mxu0 0.0
    %163 = vmatprep.subr.mxu0 0.0
    %164 = vmatpush1.msra.mxu0 0.0
    %165 = vmatprep.subr.mxu0 0.0
    %166 = vmatpush1.msra.mxu0 0.0
    %167 = vmatprep.subr.mxu0 0.0
    %168 = vmatpush1.msra.mxu0 0.0
    %169 = vmatprep.subr.mxu0 0.0
    %170 = vmatpush1.msra.mxu0 0.0
    %171 = vmatprep.subr.mxu0 0.0
    %172 = vmatpush1.msra.mxu0 0.0
    %173 = vmatprep.subr.mxu0 0.0
    %174 = vmatpush1.msra.mxu0 0.0
    %175 = vmatprep.subr.mxu0 0.0
    %176 = vmatpush1.msra.mxu0 0.0
    %177 = vmatprep.subr.mxu0 0.0
    %178 = vmatpush1.msra.mxu0 0.0
    %179 = vmatprep.subr.mxu0 0.0
    %180 = vmatpush1.msra.mxu0 0.0
    %181 = vmatprep.subr.mxu0 0.0
    %182 = vmatpush1.msra.mxu0 0.0
    %183 = vmatprep.subr.mxu0 0.0
    %184 = vmatpush1.msra.mxu0 0.0
    %185 = vmatprep.subr.mxu0 0.0
    %186 = vmatpush1.msra.mxu0 0.0
    %187 = vmatprep.subr.mxu0 0.0
    %188 = vmatpush1.msra.mxu0 0.0
    %189 = vmatprep.subr.mxu0 0.0
    %190 = vmatpush1.msra.mxu0 0.0
    %191 = vmatprep.subr.mxu0 0.0
    %192 = vmatpush1.msra.mxu0 0.0
    %193 = vmatprep.mubr.f32.mxu0 0.0
    %194 = vmatmul.mubr.f32.gmra.mrb[0].mxu0 %v123
    %v195 = vpop.f32.mrb[0].mxu0
    %v196 = vadd.f32 0.0, %v195
    %v197 = vpop.f32.mrb[0].mxu0
    %198 = vdwg.mxu0
    %v200 = vsel %vm121, %v117, 0
    %v203 = vsel %vm125, %v118, 0
    %205 = vmatprep.subr.mxu0 0.0
    %206 = vmatpush1.msra.mxu0 %v203
    %207 = vmatprep.subr.mxu0 0.0
    %208 = vmatpush1.msra.mxu0 0.0
    %209 = vmatprep.subr.mxu0 0.0
    %210 = vmatpush1.msra.mxu0 0.0
    %211 = vmatprep.subr.mxu0 0.0
    %212 = vmatpush1.msra.mxu0 0.0
    %213 = vmatprep.subr.mxu0 0.0
    %214 = vmatpush1.msra.mxu0 0.0
    %215 = vmatprep.subr.mxu0 0.0
    %216 = vmatpush1.msra.mxu0 0.0
    %217 = vmatprep.subr.mxu0 0.0
    %218 = vmatpush1.msra.mxu0 0.0
    %219 = vmatprep.subr.mxu0 0.0
    %220 = vmatpush1.msra.mxu0 0.0
    %221 = vmatprep.subr.mxu0 0.0
    %222 = vmatpush1.msra.mxu0 0.0
    %223 = vmatprep.subr.mxu0 0.0
    %224 = vmatpush1.msra.mxu0 0.0
    %225 = vmatprep.subr.mxu0 0.0
    %226 = vmatpush1.msra.mxu0 0.0
    %227 = vmatprep.subr.mxu0 0.0
    %228 = vmatpush1.msra.mxu0 0.0
    %229 = vmatprep.subr.mxu0 0.0
    %230 = vmatpush1.msra.mxu0 0.0
    %231 = vmatprep.subr.mxu0 0.0
    %232 = vmatpush1.msra.mxu0 0.0
    %233 = vmatprep.subr.mxu0 0.0
    %234 = vmatpush1.msra.mxu0 0.0
    %235 = vmatprep.subr.mxu0 0.0
    %236 = vmatpush1.msra.mxu0 0.0
    %237 = vmatprep.subr.mxu0 0.0
    %238 = vmatpush1.msra.mxu0 0.0
    %239 = vmatprep.subr.mxu0 0.0
    %240 = vmatpush1.msra.mxu0 0.0
    %241 = vmatprep.subr.mxu0 0.0
    %242 = vmatpush1.msra.mxu0 0.0
    %243 = vmatprep.subr.mxu0 0.0
    %244 = vmatpush1.msra.mxu0 0.0
    %245 = vmatprep.subr.mxu0 0.0
    %246 = vmatpush1.msra.mxu0 0.0
    %247 = vmatprep.subr.mxu0 0.0
    %248 = vmatpush1.msra.mxu0 0.0
    %249 = vmatprep.subr.mxu0 0.0
    %250 = vmatpush1.msra.mxu0 0.0
    %251 = vmatprep.subr.mxu0 0.0
    %252 = vmatpush1.msra.mxu0 0.0
    %253 = vmatprep.subr.mxu0 0.0
    %254 = vmatpush1.msra.mxu0 0.0
    %255 = vmatprep.subr.mxu0 0.0
    %256 = vmatpush1.msra.mxu0 0.0
    %257 = vmatprep.subr.mxu0 0.0
    %258 = vmatpush1.msra.mxu0 0.0
    %259 = vmatprep.subr.mxu0 0.0
    %260 = vmatpush1.msra.mxu0 0.0
    %261 = vmatprep.subr.mxu0 0.0
    %262 = vmatpush1.msra.mxu0 0.0
    %263 = vmatprep.subr.mxu0 0.0
    %264 = vmatpush1.msra.mxu0 0.0
    %265 = vmatprep.subr.mxu0 0.0
    %266 = vmatpush1.msra.mxu0 0.0
    %267 = vmatprep.subr.mxu0 0.0
    %268 = vmatpush1.msra.mxu0 0.0
    %269 = vmatprep.mubr.f32.mxu0 0.0
    %270 = vmatmul.mubr.f32.gmra.mrb[0].mxu0 %v200
    %v271 = vpop.f32.mrb[0].mxu0
    %v272 = vadd.f32 %v196, %v271
    %v273 = vpop.f32.mrb[0].mxu0
    %274 = vdwg.mxu0
    %v275 = vld [vmem:[%s3] sm:$0x1]
    %v277 = vlaneseq
    %v278 = vshrl.u32 %v277, 7
    %v279 = vsub.s32 0, %v278
    %v280 = vrot.slane %v275, %v279
    %v282 = vadd.f32 %v272, %v280
    %283 = vst [vmem:[#allocation9] sm:$0x3] %v282
    // Predicated region
    $region30: #{tpu_custom_call.1} parent=1 // pred_check
      _
    $region31: #{tpu_custom_call.1} parent=1 // pred_check_branch
      %285 = sbr.rel (0) target = $region33
    $region32: #{tpu_custom_call.1} parent=1 // pred_region
      %s287 = ssub.s32 32, 32
      %288 = vsyncadd [#allocation6], %s287
      %s290 = sshll.u32 [#allocation9], 4
      %s291 = int_to_ptr.vmem [resolvable:$true] %s290
      %293 = dma.vmem_to_hbm [thread:$0]  %s291, 32, %s4, [#allocation6]
    $region33: #{tpu_custom_call.1} parent=1 // pred_fallthru
      _
    // Predicated region
    $region34: #{tpu_custom_call.1} parent=1 // pred_check
      _
    $region35: #{tpu_custom_call.1} parent=1 // pred_check_branch
      %295 = sbr.rel (0) target = $region37
    $region36: #{tpu_custom_call.1} parent=1 // pred_region
      %296 = dma.done [#allocation6], 32
    $region37: #{tpu_custom_call.1} parent=1 // pred_fallthru
      _
    %297 = vsyncpa [#allocation5], 1
    %298 = vsyncpa [#allocation8], 1
    %299 = vsyncpa [#allocation6], 1

</llo_original>
